<compile_context>
chip_gen: v6e
topology: v6e:2x2x1
jax: 0.10.0
libtpu: 0.0.40
codegen_flags: <defaults>
</compile_context>

<pallas_src>
import functools
import math

import jax
import jax.numpy as jnp
from jax.experimental import pallas as pl
from jax.experimental.pallas import tpu as pltpu

LANES = 128
SUBLANES = 8
MAX_TILE_ROWS = 2048     # 2048 x 128 x 4 B = 1 MiB per f32 input block (x2 inputs x2 bufs = 4 MiB)
MIN_SPLIT_ROWS = 512     # only shard across 2 cores when each part gets a decent chunk


def _ceil_to(x, m):
    return ((x + m - 1) // m) * m


def _sublane_multiple(dtype):
    itemsize = jnp.dtype(dtype).itemsize
    if itemsize >= 4:
        return SUBLANES
    return SUBLANES * (4 // itemsize)   # bf16 -> 16, int8/bool -> 32


def _focal_kernel(p_ref, t_ref, o_ref, *, gamma, logits, n_valid, need_mask):
    j = pl.program_id(0)            # partial-sum index ("parallel" axis, v7x cores)
    i = pl.program_id(1)            # tile within this partial ("arbitrary" axis)

    @pl.when(i == 0)
    def _init():
        o_ref[...] = jnp.zeros_like(o_ref)

    x = p_ref[...].astype(jnp.float32)
    t = t_ref[...].astype(jnp.float32)

    if logits:
        # Numerically stable BCE-with-logits (matches F.binary_cross_entropy_with_logits).
        bce = jnp.maximum(x, 0.0) - x * t + jnp.log1p(jnp.exp(-jnp.abs(x)))
    else:
        # F.binary_cross_entropy clamps the log terms at -100.
        log_p = jnp.maximum(jnp.log(x), -100.0)
        log_1mp = jnp.maximum(jnp.log(1.0 - x), -100.0)
        bce = -(t * log_p + (1.0 - t) * log_1mp)

    pt = jnp.exp(-bce)
    one_m_pt = 1.0 - pt

    g = float(gamma)
    if g == 0.0:
        w = jnp.ones_like(bce)
    elif g == 1.0:
        w = one_m_pt
    elif g == 2.0:
        w = one_m_pt * one_m_pt          # plain square: no pow -> no extra EUP exp/log
    elif g.is_integer() and g > 0:
        w = one_m_pt
        for _ in range(int(g) - 1):
            w = w * one_m_pt
    else:
        # Non-integer gamma: clamp to avoid NaN from a tiny negative (1 - pt).
        w = jnp.maximum(one_m_pt, 0.0) ** g

    f_loss = w * bce

    if need_mask:
        tile_rows = f_loss.shape[0]
        tile_idx = j * pl.num_programs(1) + i
        rid = jax.lax.broadcasted_iota(jnp.int32, f_loss.shape, 0)
        lid = jax.lax.broadcasted_iota(jnp.int32, f_loss.shape, 1)
        gidx = (tile_idx * tile_rows + rid) * LANES + lid
        f_loss = jnp.where(gidx < n_valid, f_loss, 0.0)

    # Reduce only over sublane groups (pure VPU vreg adds); the cross-lane reduction
    # to a scalar happens once, outside the kernel.
    o_ref[...] += f_loss.reshape(-1, SUBLANES, LANES).sum(axis=0)


def focal_loss(outputs, targets, *, gamma=2.0, logits=False):
    """Mean focal loss over all elements (reduce=True semantics)."""
    # TODO(synk): reduce=False (per-element loss map) not implemented; default module config is reduce=True.
    assert outputs.shape == targets.shape
    n_valid = int(math.prod(outputs.shape))

    sub = max(_sublane_multiple(outputs.dtype), _sublane_multiple(targets.dtype))
    rows_min = max(_ceil_to(pl.cdiv(n_valid, LANES), sub), sub)

    num_partials = 2 if rows_min >= MIN_SPLIT_ROWS else 1
    tiles_per_part = max(1, pl.cdiv(rows_min, MAX_TILE_ROWS * num_partials))
    tile_rows = _ceil_to(pl.cdiv(rows_min, num_partials * tiles_per_part), sub)
    rows = tile_rows * num_partials * tiles_per_part
    padded = rows * LANES

    # Keep native dtypes (cast to f32 on the VPU inside the kernel).  Only pad when
    # the element count doesn't tile evenly; padded elements are masked in-kernel.
    flat_p = jnp.ravel(outputs)
    flat_t = jnp.ravel(targets)
    need_mask = padded != n_valid
    if need_mask:
        flat_p = jnp.pad(flat_p, (0, padded - n_valid))
        flat_t = jnp.pad(flat_t, (0, padded - n_valid))

    p2d = flat_p.reshape(rows, LANES)
    t2d = flat_t.reshape(rows, LANES)

    kernel = functools.partial(
        _focal_kernel,
        gamma=float(gamma),
        logits=bool(logits),
        n_valid=n_valid,
        need_mask=need_mask,
    )

    in_map = lambda j, i, T=tiles_per_part: (j * T + i, 0)

    partials = pl.pallas_call(
        kernel,
        out_shape=jax.ShapeDtypeStruct((num_partials * SUBLANES, LANES), jnp.float32),
        grid_spec=pltpu.PrefetchScalarGridSpec(
            num_scalar_prefetch=0,
            grid=(num_partials, tiles_per_part),
            in_specs=[
                pl.BlockSpec((tile_rows, LANES), in_map),
                pl.BlockSpec((tile_rows, LANES), in_map),
            ],
            out_specs=pl.BlockSpec((SUBLANES, LANES), lambda j, i: (j, 0)),
        ),
        compiler_params=pltpu.CompilerParams(
            dimension_semantics=("parallel", "arbitrary")
        ),
    )(p2d, t2d)

    # Single cross-lane/sublane reduction + mean normalization.
    return jnp.sum(partials) / jnp.float32(n_valid)


def _focal_loss_ref(outputs, targets, gamma=2.0, logits=False):
    x = outputs.astype(jnp.float32)
    t = targets.astype(jnp.float32)
    if logits:
        bce = jnp.maximum(x, 0.0) - x * t + jnp.log1p(jnp.exp(-jnp.abs(x)))
    else:
        bce = -(t * jnp.maximum(jnp.log(x), -100.0)
                + (1.0 - t) * jnp.maximum(jnp.log(1.0 - x), -100.0))
    pt = jnp.exp(-bce)
    return jnp.mean((1.0 - pt) ** gamma * bce)


if __name__ == "__main__":
    key = jax.random.PRNGKey(0)
    k1, k2 = jax.random.split(key)

    # Module forward takes (outputs, targets); with logits=False outputs are probabilities.
    shape = (2, 4, 16, 16)
    outputs = jax.nn.sigmoid(jax.random.normal(k1, shape, jnp.float32))
    targets = (jax.random.uniform(k2, shape) > 0.5).astype(jnp.float32)

    loss = focal_loss(outputs, targets, gamma=2.0, logits=False)
    jax.block_until_ready(loss)

    ref = _focal_loss_ref(outputs, targets, gamma=2.0, logits=False)
    assert jnp.allclose(loss, ref, rtol=1e-5, atol=1e-6), (loss, ref)

    print("KERNEL_OK")
</pallas_src>

<mosaic_0001>
module attributes {stable_mosaic.version = 11 : i64} {
  func.func @_focal_kernel(%arg0: i32, %arg1: i32, %arg2: memref<16x128xf32, #tpu.memory_space<vmem>>, %arg3: memref<16x128xf32, #tpu.memory_space<vmem>>, %arg4: memref<8x128xf32, #tpu.memory_space<vmem>>) attributes {dimension_semantics = [#tpu.dimension_semantics<parallel>, #tpu.dimension_semantics<arbitrary>], iteration_bounds = array<i64: 1, 1>, scalar_prefetch = 0 : i64, scratch_operands = 0 : i64, tpu.core_type = #tpu.core_type<tc>, window_params = [{transform_indices = @transform_0, window_bounds = array<i64: 16, 128>}, {transform_indices = @transform_1, window_bounds = array<i64: 16, 128>}, {transform_indices = @transform_2, window_bounds = array<i64: 8, 128>}]} {
    %c0_i32 = arith.constant 0 : i32
    %0 = arith.cmpi eq, %arg1, %c0_i32 : i32
    %1 = arith.extui %0 : i1 to i32
    %c0_i32_0 = arith.constant 0 : i32
    %2 = arith.cmpi ne, %1, %c0_i32_0 : i32
    scf.if %2 {
      %cst_15 = arith.constant 0.000000e+00 : f32
      %32 = vector.broadcast %cst_15 : f32 to vector<8x128xf32>
      %c0_16 = arith.constant 0 : index
      %c0_17 = arith.constant 0 : index
      %33 = vector.load %arg4[%c0_16, %c0_17] : memref<8x128xf32, #tpu.memory_space<vmem>>, vector<8x128xf32>
      tpu.vector_store %arg4[%c0_16, %c0_17], %32 {strides = array<i32>} : memref<8x128xf32, #tpu.memory_space<vmem>>, vector<8x128xf32>,
    } else {
    }
    %c0 = arith.constant 0 : index
    %c0_1 = arith.constant 0 : index
    %3 = vector.load %arg2[%c0, %c0_1] : memref<16x128xf32, #tpu.memory_space<vmem>>, vector<16x128xf32>
    %c0_2 = arith.constant 0 : index
    %c0_3 = arith.constant 0 : index
    %4 = vector.load %arg3[%c0_2, %c0_3] : memref<16x128xf32, #tpu.memory_space<vmem>>, vector<16x128xf32>
    %5 = math.log %3 : vector<16x128xf32>
    %cst = arith.constant -1.000000e+02 : f32
    %6 = vector.broadcast %cst : f32 to vector<16x128xf32>
    %7 = arith.maximumf %5, %6 : vector<16x128xf32>
    %cst_4 = arith.constant 1.000000e+00 : f32
    %8 = vector.broadcast %cst_4 : f32 to vector<16x128xf32>
    %9 = arith.subf %8, %3 : vector<16x128xf32>
    %10 = math.log %9 : vector<16x128xf32>
    %cst_5 = arith.constant -1.000000e+02 : f32
    %11 = vector.broadcast %cst_5 : f32 to vector<16x128xf32>
    %12 = arith.maximumf %10, %11 : vector<16x128xf32>
    %13 = arith.mulf %4, %7 : vector<16x128xf32>
    %cst_6 = arith.constant 1.000000e+00 : f32
    %14 = vector.broadcast %cst_6 : f32 to vector<16x128xf32>
    %15 = arith.subf %14, %4 : vector<16x128xf32>
    %16 = arith.mulf %15, %12 : vector<16x128xf32>
    %17 = arith.addf %13, %16 : vector<16x128xf32>
    %cst_7 = arith.constant 0.000000e+00 : f32
    %18 = vector.broadcast %cst_7 : f32 to vector<16x128xf32>
    %19 = arith.subf %18, %17 : vector<16x128xf32>
    %cst_8 = arith.constant 0.000000e+00 : f32
    %20 = vector.broadcast %cst_8 : f32 to vector<16x128xf32>
    %21 = arith.subf %20, %19 : vector<16x128xf32>
    %22 = math.exp %21 : vector<16x128xf32>
    %cst_9 = arith.constant 1.000000e+00 : f32
    %23 = vector.broadcast %cst_9 : f32 to vector<16x128xf32>
    %24 = arith.subf %23, %22 : vector<16x128xf32>
    %25 = arith.mulf %24, %24 : vector<16x128xf32>
    %26 = arith.mulf %25, %19 : vector<16x128xf32>
    %c0_10 = arith.constant 0 : index
    %c0_11 = arith.constant 0 : index
    %27 = vector.load %arg4[%c0_10, %c0_11] : memref<8x128xf32, #tpu.memory_space<vmem>>, vector<8x128xf32>
    %28 = vector.shape_cast %26 : vector<16x128xf32> to vector<2x8x128xf32>
    %cst_12 = arith.constant dense<0.000000e+00> : vector<8x128xf32>
    %29 = vector.multi_reduction <add>, %28, %cst_12 [0] : vector<2x8x128xf32> to vector<8x128xf32>
    %30 = arith.addf %27, %29 : vector<8x128xf32>
    %c0_13 = arith.constant 0 : index
    %c0_14 = arith.constant 0 : index
    %31 = vector.load %arg4[%c0_13, %c0_14] : memref<8x128xf32, #tpu.memory_space<vmem>>, vector<8x128xf32>
    tpu.vector_store %arg4[%c0_13, %c0_14], %30 {strides = array<i32>} : memref<8x128xf32, #tpu.memory_space<vmem>>, vector<8x128xf32>,
    return
  }
  func.func @transform_0(%arg0: i32, %arg1: i32) -> (i32, i32) {
    %c1_i32 = arith.constant 1 : i32
    %0 = arith.muli %arg0, %c1_i32 : i32
    %1 = arith.addi %0, %arg1 : i32
    %c0_i32 = arith.constant 0 : i32
    %c0_i32_0 = arith.constant 0 : i32
    return %1, %c0_i32 : i32, i32
  }
  func.func @transform_1(%arg0: i32, %arg1: i32) -> (i32, i32) {
    %c1_i32 = arith.constant 1 : i32
    %0 = arith.muli %arg0, %c1_i32 : i32
    %1 = arith.addi %0, %arg1 : i32
    %c0_i32 = arith.constant 0 : i32
    %c0_i32_0 = arith.constant 0 : i32
    return %1, %c0_i32 : i32, i32
  }
  func.func @transform_2(%arg0: i32, %arg1: i32) -> (i32, i32) {
    %c0_i32 = arith.constant 0 : i32
    %c0_i32_0 = arith.constant 0 : i32
    return %arg0, %c0_i32 : i32, i32
  }
}

</mosaic_0001>

<llo_original>
// kernel: tpu_custom_call.1
$region0: #{tpu_custom_call.1}
  #allocation0 [shape = 'u32[]', space=smem, size = 0x4, offset = 0x4, fixed_abs, tag = 'smem constant byte address 0x4 - core index']
  #allocation1 [shape = 'u32[144,128]{1,0:T(1,128)}', space=vmem, size = 0x12000, scoped, tag = 'internal scratch']
  %s0 = inlined_call_operand.hbm [shape: f32[16,128], index: 0, kind: input, shape index: {}]
  %s1 = inlined_call_operand.hbm [shape: f32[16,128], index: 1, kind: input, shape index: {}]
  %s2 = inlined_call_operand.hbm [shape: f32[8,128], index: 2, kind: output, shape index: {}]
  %s3 = sld [smem:[#allocation0]]
  $region30: #{tpu_custom_call.1} parent=0
    _
  %s5 = ssub.s32 1, %s3
  %s6 = scalar_select 0, %s5, %s3
  $region1: #{tpu_custom_call.1} parent=0
    #allocation2 [shape = 'u8[8192]{0}', space=vmem, size = 0x2000, scoped, tag = 'input window, operand 0, single buffered']
    #allocation3 [shape = 's32[1]{0}', space=sflag, size = 0x4, scoped, tag = 'scoped memory for tpu_custom_call.1']
    #allocation4 [shape = 's32[1]{0}', space=sflag, size = 0x4, scoped, tag = 'scoped memory for tpu_custom_call.1']
    #allocation5 [shape = 'u8[8192]{0}', space=vmem, size = 0x2000, scoped, tag = 'input window, operand 1, single buffered']
    #allocation6 [shape = 's32[1]{0}', space=sflag, size = 0x4, scoped, tag = 'scoped memory for tpu_custom_call.1']
    #allocation7 [shape = 'u8[4096]{0}', space=vmem, size = 0x1000, scoped, tag = 'output window, operand 0, single buffered']
    %7 = vsyncpa [#allocation3], 0
    %8 = vsyncpa [#allocation6], 0
    %9 = vsyncpa [#allocation4], 0
    // Predicated region
    $region2: #{tpu_custom_call.1} parent=1 // pred_check
      _
    $region3: #{tpu_custom_call.1} parent=1 // pred_check_branch
      %11 = sbr.rel (0) target = $region5
    $region4: #{tpu_custom_call.1} parent=1 // pred_region
      %s12 = sadd.s32 0, 0
      %s13 = smul.u32 2, %s12
      %s15 = ssub.s32 256, 256
      %16 = vsyncadd [#allocation3], %s15
      %s17 = smul.addr %s13, 128
      %s18 = scalar_lea.hbm %s0, %s17
      %s19 = sshll.u32 [#allocation2], 4
      %s20 = int_to_ptr.vmem [resolvable:$true] %s19
      %25 = dma.hbm_to_vmem [thread:$0]  %s18, 256, %s20, [#allocation3], 128, 128, 8
    $region5: #{tpu_custom_call.1} parent=1 // pred_fallthru
      _
    // Predicated region
    $region6: #{tpu_custom_call.1} parent=1 // pred_check
      _
    $region7: #{tpu_custom_call.1} parent=1 // pred_check_branch
      %27 = sbr.rel (0) target = $region9
    $region8: #{tpu_custom_call.1} parent=1 // pred_region
      %s28 = sadd.s32 0, 0
      %s29 = smul.u32 2, %s28
      %s31 = ssub.s32 256, 256
      %32 = vsyncadd [#allocation6], %s31
      %s33 = smul.addr %s29, 128
      %s34 = scalar_lea.hbm %s1, %s33
      %s35 = sshll.u32 [#allocation5], 4
      %s36 = int_to_ptr.vmem [resolvable:$true] %s35
      %41 = dma.hbm_to_vmem [thread:$0]  %s34, 256, %s36, [#allocation6], 128, 128, 8
    $region9: #{tpu_custom_call.1} parent=1 // pred_fallthru
      _
    // Predicated region
    $region10: #{tpu_custom_call.1} parent=1 // pred_check
      _
    $region11: #{tpu_custom_call.1} parent=1 // pred_check_branch
      %43 = sbr.rel (0) target = $region13
    $region12: #{tpu_custom_call.1} parent=1 // pred_region
      %44 = dma.done [#allocation3], 256
    $region13: #{tpu_custom_call.1} parent=1 // pred_fallthru
      _
    // Predicated region
    $region14: #{tpu_custom_call.1} parent=1 // pred_check
      _
    $region15: #{tpu_custom_call.1} parent=1 // pred_check_branch
      %46 = sbr.rel (0) target = $region17
    $region16: #{tpu_custom_call.1} parent=1 // pred_region
      %47 = dma.done [#allocation6], 256
    $region17: #{tpu_custom_call.1} parent=1 // pred_fallthru
      _
    %s48 = sadd.s32 0, 0
    %s49 = smul.u32 2, %s48
    %s50 = sadd.s32 0, 0
    %s51 = smul.u32 2, %s50
    %p52 = scmp.eq.s32.totalorder 0, 0
    // Predicated region
    $region18: #{tpu_custom_call.1} parent=1 // pred_check
      %p53 = pneg %p52
    $region19: #{tpu_custom_call.1} parent=1 // pred_check_branch
      %55 = sbr.rel (%p53) target = $region21
    $region20: #{tpu_custom_call.1} parent=1 // pred_region
      %56 = vst [vmem:[#allocation7] sm:$0xff] 0.0
    $region21: #{tpu_custom_call.1} parent=1 // pred_fallthru
      _
    %v57 = vld [vmem:[#allocation2] sm:$0xff]
    %v58 = vld [vmem:[#allocation2 + $0x8] sm:$0xff]
    %v59 = vld [vmem:[#allocation5] sm:$0xff]
    %v60 = vld [vmem:[#allocation5 + $0x8] sm:$0xff]
    %v61 = vlog2.pop %v57
    %v62 = vmul.f32 %v61, 0.6931472
    %v63 = vlog2.pop %v58
    %v64 = vmul.f32 %v63, 0.6931472
    %v65 = vmax.f32 %v62, -100.0
    %v66 = vmax.f32 %v64, -100.0
    %v67 = vsub.f32 1.0, %v57
    %v68 = vsub.f32 1.0, %v58
    %v69 = vlog2.pop %v67
    %v70 = vmul.f32 %v69, 0.6931472
    %v71 = vlog2.pop %v68
    %v72 = vmul.f32 %v71, 0.6931472
    %v73 = vmax.f32 %v70, -100.0
    %v74 = vmax.f32 %v72, -100.0
    %v75 = vmul.f32 %v59, %v65
    %v76 = vmul.f32 %v60, %v66
    %v77 = vsub.f32 1.0, %v59
    %v78 = vsub.f32 1.0, %v60
    %v79 = vmul.f32 %v77, %v73
    %v80 = vmul.f32 %v78, %v74
    %v81 = vadd.f32 %v75, %v79
    %v82 = vadd.f32 %v76, %v80
    %v83 = vsub.f32 0.0, %v81
    %v84 = vsub.f32 0.0, %v82
    %v85 = vsub.f32 0.0, %v83
    %v86 = vsub.f32 0.0, %v84
    %v87 = vmul.f32 %v85, 1.442695
    %v88 = vpow.pop %v87
    %v89 = vmul.f32 %v86, 1.442695
    %v90 = vpow.pop %v89
    %v91 = vsub.f32 1.0, %v88
    %v92 = vsub.f32 1.0, %v90
    %v93 = vmul.f32 %v91, %v91
    %v94 = vmul.f32 %v92, %v92
    %v95 = vmul.f32 %v93, %v83
    %v96 = vmul.f32 %v94, %v84
    %v97 = vld [vmem:[#allocation7] sm:$0xff]
    %v98 = vadd.f32 %v95, %v96
    %v99 = vadd.f32 %v97, %v98
    %100 = vst [vmem:[#allocation7] sm:$0xff] %v99
    // Predicated region
    $region22: #{tpu_custom_call.1} parent=1 // pred_check
      _
    $region23: #{tpu_custom_call.1} parent=1 // pred_check_branch
      %102 = sbr.rel (0) target = $region25
    $region24: #{tpu_custom_call.1} parent=1 // pred_region
      %s104 = ssub.s32 128, 128
      %105 = vsyncadd [#allocation4], %s104
      %s107 = sshll.u32 [#allocation7], 4
      %s108 = int_to_ptr.vmem [resolvable:$true] %s107
      %110 = dma.vmem_to_hbm [thread:$0]  %s108, 128, %s2, [#allocation4]
    $region25: #{tpu_custom_call.1} parent=1 // pred_fallthru
      _
    // Predicated region
    $region26: #{tpu_custom_call.1} parent=1 // pred_check
      _
    $region27: #{tpu_custom_call.1} parent=1 // pred_check_branch
      %112 = sbr.rel (0) target = $region29
    $region28: #{tpu_custom_call.1} parent=1 // pred_region
      %113 = dma.done [#allocation4], 128
    $region29: #{tpu_custom_call.1} parent=1 // pred_fallthru
      _
    %114 = vsyncpa [#allocation3], 1
    %115 = vsyncpa [#allocation6], 1
    %116 = vsyncpa [#allocation4], 1

</llo_original>
